<compile_context>
chip_gen: v7x
topology: tpu7x:2x2x1
jax: 0.10.0
libtpu: 0.0.40
codegen_flags: <defaults>
</compile_context>

<pallas_src>
import functools
import math

import jax
import jax.numpy as jnp
from jax.experimental import pallas as pl
from jax.experimental.pallas import tpu as pltpu


# ----------------------------------------------------------------------------
# Fused per-batch kernel: q/k proj -> scores (+pad bias) -> concept NLL loss
# ----------------------------------------------------------------------------

def _concept_generator_kernel(outs_ref, snt_ref, wq_ref, bq_ref, wk_ref, bk_ref,
                              bias_ref, tgt_ref, loss_ref, *, nil, scale):
    # Per grid step (one batch element b):
    #   outs_ref: (1, T, H) f32   query states
    #   snt_ref : (1, S, H) f32   key states
    #   wq/wk   : (H, H) f32      projection weights (single head -> head_dim == H)
    #   bq/bk   : (1, H) f32
    #   bias_ref: (1, 1, S) f32   key-padding additive bias (-1e9 on padded keys)
    #   tgt_ref : (1, T, 1) i32   target node index per query position
    #   loss_ref: (1, 1, 1) f32   per-batch concept loss (summed over T, NIL masked)
    x = outs_ref[0]                       # (T, H) f32
    kv = snt_ref[0]                       # (S, H) f32

    # q / k projections on the MXU: bf16 operands, f32 accumulation.
    q = jnp.dot(x.astype(jnp.bfloat16), wq_ref[...].astype(jnp.bfloat16),
                preferred_element_type=jnp.float32) + bq_ref[...]
    q = q * scale                         # (T, H) f32, scaled in f32
    k = jnp.dot(kv.astype(jnp.bfloat16), wk_ref[...].astype(jnp.bfloat16),
                preferred_element_type=jnp.float32) + bk_ref[...]      # (S, H) f32

    # One explicit transpose so the score matmul is (T,H) @ (H,S) on the MXU.
    k_t = k.T.astype(jnp.bfloat16)        # (H, S)
    s = jnp.dot(q.astype(jnp.bfloat16), k_t,
                preferred_element_type=jnp.float32)                    # (T, S) f32
    s = s + bias_ref[0]                   # (1, S) key-padding bias, broadcast add

    # Loss without a full-tensor divide/log: gather the raw target score, then
    # p_tgt = exp(s_tgt - m) / sum(exp(s - m)) and nll = -log(p_tgt + 1e-12),
    # which is exactly the reference log(softmax + 1e-12) gather.
    m = jnp.max(s, axis=-1, keepdims=True)                             # (T, 1)
    denom = jnp.sum(jnp.exp(s - m), axis=-1, keepdims=True)            # (T, 1)

    tgt = tgt_ref[0]                                                   # (T, 1) i32
    col = jax.lax.broadcasted_iota(jnp.int32, (1, s.shape[-1]), 1)     # (1, S)
    onehot = col == tgt                                                # (T, S) bool
    s_tgt = jnp.sum(jnp.where(onehot, s, 0.0), axis=-1, keepdims=True) # (T, 1)

    p_tgt = jnp.exp(s_tgt - m) / denom                                 # (T, 1) exact
    nll = jnp.where(tgt == nil, 0.0, -jnp.log(p_tgt + 1e-12))          # (T, 1)

    loss_ref[...] = jnp.sum(nll, axis=0, keepdims=True)[None]          # (1, 1, 1)

    # TODO(synk): value/output projection (x), its dropout, and the unused
    # alignment_layer_norm are dead code in the work=False branch and are not
    # computed here.


# ----------------------------------------------------------------------------
# Python wrapper (jit-ed at the call site)
# ----------------------------------------------------------------------------

def concept_generator_forward(params, outs, snt_state, snt_padding_mask, target, *, nil):
    """outs: (T,B,H) f32; snt_state: (S,B,H) f32; snt_padding_mask: (S,B) bool
    (True = padded key); target: (T,B) int32.  Returns concept_loss: (B,) f32."""
    T, B, H = outs.shape
    S = snt_state.shape[0]
    scale = 1.0 / math.sqrt(H)            # single head -> head_dim == H

    # Layout plumbing to batch-major so the grid can tile over B with clean
    # (1, T, H)/(1, S, H) blocks.
    # TODO(synk): at production shapes, block the native (T,B,H)/(S,B,H) layout
    # directly (Squeezed batch dim in the BlockSpec) to avoid this HBM transpose,
    # and tile/pad S up to multiples of 128 on the lane axis.
    outs_b = outs.transpose(1, 0, 2).astype(jnp.float32)               # (B, T, H)
    snt_b = snt_state.transpose(1, 0, 2).astype(jnp.float32)           # (B, S, H)
    bias = jnp.where(snt_padding_mask.T, -1e9, 0.0).astype(jnp.float32)[:, None, :]  # (B,1,S)
    tgt = target.T.astype(jnp.int32)[:, :, None]                       # (B, T, 1)

    wq = params['wq'].astype(jnp.float32)
    bq = params['bq'].reshape(1, H).astype(jnp.float32)
    wk = params['wk'].astype(jnp.float32)
    bk = params['bk'].reshape(1, H).astype(jnp.float32)

    kernel = functools.partial(_concept_generator_kernel, nil=nil, scale=scale)

    loss = pl.pallas_call(
        kernel,
        grid=(B,),
        in_specs=[
            pl.BlockSpec((1, T, H), lambda b: (b, 0, 0)),   # outs (per batch)
            pl.BlockSpec((1, S, H), lambda b: (b, 0, 0)),   # snt_state (per batch)
            pl.BlockSpec((H, H), lambda b: (0, 0)),         # wq (resident)
            pl.BlockSpec((1, H), lambda b: (0, 0)),         # bq
            pl.BlockSpec((H, H), lambda b: (0, 0)),         # wk
            pl.BlockSpec((1, H), lambda b: (0, 0)),         # bk
            pl.BlockSpec((1, 1, S), lambda b: (b, 0, 0)),   # key-padding bias
            pl.BlockSpec((1, T, 1), lambda b: (b, 0, 0)),   # targets
        ],
        out_specs=pl.BlockSpec((1, 1, 1), lambda b: (b, 0, 0)),
        out_shape=jax.ShapeDtypeStruct((B, 1, 1), jnp.float32),
        compiler_params=pltpu.CompilerParams(dimension_semantics=("parallel",)),
    )(outs_b, snt_b, wq, bq, wk, bk, bias, tgt)

    return loss[:, 0, 0]


# ----------------------------------------------------------------------------
# Pure-JAX reference (correctness check only)
# ----------------------------------------------------------------------------

def concept_generator_ref(params, outs, snt_state, snt_padding_mask, target, nil):
    T, B, H = outs.shape
    scale = 1.0 / math.sqrt(H)
    q = (outs @ params['wq'] + params['bq']) * scale               # (T, B, H)
    k = snt_state @ params['wk'] + params['bk']                    # (S, B, H)
    s = jnp.einsum('tbh,sbh->bts', q, k)
    s = s + jnp.where(snt_padding_mask.T[:, None, :], -1e9, 0.0)
    p = jax.nn.softmax(s, axis=-1)                                 # (B, T, S)
    ll = jnp.log(p + 1e-12)
    tgt_bt = target.T
    picked = jnp.take_along_axis(ll, tgt_bt[:, :, None], axis=-1)[..., 0]
    nll = jnp.where(tgt_bt == nil, 0.0, -picked)
    return jnp.sum(nll, axis=-1)                                   # (B,)


# ----------------------------------------------------------------------------
# Deterministic parameter init
# ----------------------------------------------------------------------------

def init_params(key, H):
    kq, kk, kv, ko, kbq, kbk = jax.random.split(key, 6)
    return {
        'wq': 0.1 * jax.random.normal(kq, (H, H), jnp.float32),
        'wk': 0.1 * jax.random.normal(kk, (H, H), jnp.float32),
        'bq': 0.02 * jax.random.normal(kbq, (H,), jnp.float32),
        'bk': 0.02 * jax.random.normal(kbk, (H,), jnp.float32),
        # value / out-proj weights exist in the PyTorch module but are dead in
        # the work=False loss path; kept only for structural parity.
        'wv': 0.1 * jax.random.normal(kv, (H, H), jnp.float32),
        'wo': 0.1 * jax.random.normal(ko, (H, H), jnp.float32),
        'bv': jnp.zeros((H,), jnp.float32),
        'bo': jnp.zeros((H,), jnp.float32),
    }


# ----------------------------------------------------------------------------
# main
# ----------------------------------------------------------------------------

if __name__ == "__main__":
    T, B, H = 8, 2, 32        # concept seq len, batch, embed_dim (hidden)
    S = 16                    # sentence/node sequence length
    NIL = S - 1               # config.NIL

    root = jax.random.PRNGKey(0)
    kp, k1, k2, k3 = jax.random.split(root, 4)

    params = init_params(kp, H)

    outs = jax.random.normal(k1, (T, B, H), jnp.float32)             # decoder states
    snt_state = jax.random.normal(k2, (S, B, H), jnp.float32)        # sentence states
    snt_padding_mask = jnp.zeros((S, B), bool).at[S - 4:, 1].set(True)
    target = jax.random.randint(k3, (T, B), 0, S, jnp.int32)
    target = target.at[T - 1, 1].set(NIL)                            # exercise NIL mask

    fwd = jax.jit(functools.partial(concept_generator_forward, nil=NIL))
    concept_loss = fwd(params, outs, snt_state, snt_padding_mask, target)
    jax.block_until_ready(concept_loss)

    ref = concept_generator_ref(params, outs, snt_state, snt_padding_mask, target, NIL)
    if not bool(jnp.allclose(concept_loss, ref, rtol=2e-3, atol=2e-3)):
        raise SystemExit(f"MISMATCH: kernel={concept_loss} ref={ref}")

    print("KERNEL_OK")
</pallas_src>

<mosaic_0001>
module attributes {stable_mosaic.version = 11 : i64} {
  func.func @_concept_generator_kernel(%arg0: i32, %arg1: memref<1x8x32xf32, #tpu.memory_space<vmem>>, %arg2: memref<1x16x32xf32, #tpu.memory_space<vmem>>, %arg3: memref<32x32xf32, #tpu.memory_space<vmem>>, %arg4: memref<1x32xf32, #tpu.memory_space<vmem>>, %arg5: memref<32x32xf32, #tpu.memory_space<vmem>>, %arg6: memref<1x32xf32, #tpu.memory_space<vmem>>, %arg7: memref<1x1x16xf32, #tpu.memory_space<vmem>>, %arg8: memref<1x8x1xi32, #tpu.memory_space<vmem>>, %arg9: memref<1x1x1xf32, #tpu.memory_space<vmem>>) attributes {dimension_semantics = [#tpu.dimension_semantics<parallel>], iteration_bounds = array<i64: 2>, scalar_prefetch = 0 : i64, scratch_operands = 0 : i64, tpu.core_type = #tpu.core_type<tc>, window_params = [{transform_indices = @transform_0, window_bounds = array<i64: 1, 8, 32>}, {transform_indices = @transform_1, window_bounds = array<i64: 1, 16, 32>}, {pipeline_mode = #tpu.pipeline_mode<synchronous>, transform_indices = @transform_2, window_bounds = array<i64: 32, 32>}, {pipeline_mode = #tpu.pipeline_mode<synchronous>, transform_indices = @transform_3, window_bounds = array<i64: 1, 32>}, {pipeline_mode = #tpu.pipeline_mode<synchronous>, transform_indices = @transform_4, window_bounds = array<i64: 32, 32>}, {pipeline_mode = #tpu.pipeline_mode<synchronous>, transform_indices = @transform_5, window_bounds = array<i64: 1, 32>}, {transform_indices = @transform_6, window_bounds = array<i64: 1, 1, 16>}, {transform_indices = @transform_7, window_bounds = array<i64: 1, 8, 1>}, {transform_indices = @transform_8, window_bounds = array<i64: 1, 1, 1>}]} {
    %c0 = arith.constant 0 : index
    %c0_0 = arith.constant 0 : index
    %c0_1 = arith.constant 0 : index
    %0 = vector.load %arg1[%c0, %c0_0, %c0_1] : memref<1x8x32xf32, #tpu.memory_space<vmem>>, vector<1x8x32xf32>
    %1 = vector.shape_cast %0 : vector<1x8x32xf32> to vector<8x32xf32>
    %c0_2 = arith.constant 0 : index
    %c0_3 = arith.constant 0 : index
    %c0_4 = arith.constant 0 : index
    %2 = vector.load %arg2[%c0_2, %c0_3, %c0_4] : memref<1x16x32xf32, #tpu.memory_space<vmem>>, vector<1x16x32xf32>
    %3 = vector.shape_cast %2 : vector<1x16x32xf32> to vector<16x32xf32>
    %4 = arith.truncf %1 : vector<8x32xf32> to vector<8x32xbf16>
    %c0_5 = arith.constant 0 : index
    %c0_6 = arith.constant 0 : index
    %5 = vector.load %arg3[%c0_5, %c0_6] : memref<32x32xf32, #tpu.memory_space<vmem>>, vector<32x32xf32>
    %6 = arith.truncf %5 : vector<32x32xf32> to vector<32x32xbf16>
    %cst = arith.constant dense<0.000000e+00> : vector<8x32xf32>
    %7 = tpu.matmul %4, %6, %cst {dimension_numbers = #tpu.dot_dimension_numbers<[1], [0], [0], [1], [0, 0, 1, 1], [], []>} : vector<8x32xbf16>, vector<32x32xbf16>, vector<8x32xf32> -> vector<8x32xf32>
    %c0_7 = arith.constant 0 : index
    %c0_8 = arith.constant 0 : index
    %8 = vector.load %arg4[%c0_7, %c0_8] : memref<1x32xf32, #tpu.memory_space<vmem>>, vector<1x32xf32>
    %9 = vector.broadcast %8 : vector<1x32xf32> to vector<8x32xf32>
    %10 = arith.addf %7, %9 : vector<8x32xf32>
    %cst_9 = arith.constant 0.176776692 : f32
    %11 = vector.broadcast %cst_9 : f32 to vector<8x32xf32>
    %12 = arith.mulf %10, %11 : vector<8x32xf32>
    %13 = arith.truncf %3 : vector<16x32xf32> to vector<16x32xbf16>
    %c0_10 = arith.constant 0 : index
    %c0_11 = arith.constant 0 : index
    %14 = vector.load %arg5[%c0_10, %c0_11] : memref<32x32xf32, #tpu.memory_space<vmem>>, vector<32x32xf32>
    %15 = arith.truncf %14 : vector<32x32xf32> to vector<32x32xbf16>
    %cst_12 = arith.constant dense<0.000000e+00> : vector<16x32xf32>
    %16 = tpu.matmul %13, %15, %cst_12 {dimension_numbers = #tpu.dot_dimension_numbers<[1], [0], [0], [1], [0, 0, 1, 1], [], []>} : vector<16x32xbf16>, vector<32x32xbf16>, vector<16x32xf32> -> vector<16x32xf32>
    %c0_13 = arith.constant 0 : index
    %c0_14 = arith.constant 0 : index
    %17 = vector.load %arg6[%c0_13, %c0_14] : memref<1x32xf32, #tpu.memory_space<vmem>>, vector<1x32xf32>
    %18 = vector.broadcast %17 : vector<1x32xf32> to vector<16x32xf32>
    %19 = arith.addf %16, %18 : vector<16x32xf32>
    %20 = tpu.transpose %19, [1, 0] : vector<16x32xf32> -> vector<32x16xf32>
    %21 = arith.truncf %20 : vector<32x16xf32> to vector<32x16xbf16>
    %22 = arith.truncf %12 : vector<8x32xf32> to vector<8x32xbf16>
    %cst_15 = arith.constant dense<0.000000e+00> : vector<8x16xf32>
    %23 = tpu.matmul %22, %21, %cst_15 {dimension_numbers = #tpu.dot_dimension_numbers<[1], [0], [0], [1], [0, 0, 1, 1], [], []>} : vector<8x32xbf16>, vector<32x16xbf16>, vector<8x16xf32> -> vector<8x16xf32>
    %c0_16 = arith.constant 0 : index
    %c0_17 = arith.constant 0 : index
    %c0_18 = arith.constant 0 : index
    %24 = vector.load %arg7[%c0_16, %c0_17, %c0_18] : memref<1x1x16xf32, #tpu.memory_space<vmem>>, vector<1x1x16xf32>
    %25 = vector.shape_cast %24 : vector<1x1x16xf32> to vector<1x16xf32>
    %26 = vector.broadcast %25 : vector<1x16xf32> to vector<8x16xf32>
    %27 = arith.addf %23, %26 : vector<8x16xf32>
    %cst_19 = arith.constant dense<0xFF800000> : vector<8xf32>
    %28 = vector.multi_reduction <maximumf>, %27, %cst_19 [1] : vector<8x16xf32> to vector<8xf32>
    %29 = vector.shape_cast %28 : vector<8xf32> to vector<8x1xf32>
    %30 = vector.broadcast %29 : vector<8x1xf32> to vector<8x16xf32>
    %31 = arith.subf %27, %30 : vector<8x16xf32>
    %32 = math.exp %31 : vector<8x16xf32>
    %cst_20 = arith.constant dense<0.000000e+00> : vector<8xf32>
    %33 = vector.multi_reduction <add>, %32, %cst_20 [1] : vector<8x16xf32> to vector<8xf32>
    %34 = vector.shape_cast %33 : vector<8xf32> to vector<8x1xf32>
    %c0_21 = arith.constant 0 : index
    %c0_22 = arith.constant 0 : index
    %c0_23 = arith.constant 0 : index
    %35 = vector.load %arg8[%c0_21, %c0_22, %c0_23] : memref<1x8x1xi32, #tpu.memory_space<vmem>>, vector<1x8x1xi32>
    %36 = vector.shape_cast %35 : vector<1x8x1xi32> to vector<8x1xi32>
    %37 = tpu.iota {dimensions = array<i32: 1>} : vector<1x16xi32>
    %38 = vector.broadcast %37 : vector<1x16xi32> to vector<8x16xi32>
    %39 = vector.broadcast %36 : vector<8x1xi32> to vector<8x16xi32>
    %40 = arith.cmpi eq, %38, %39 : vector<8x16xi32>
    %cst_24 = arith.constant 0.000000e+00 : f32
    %41 = vector.broadcast %cst_24 : f32 to vector<8x16xf32>
    %42 = arith.select %40, %27, %41 : vector<8x16xi1>, vector<8x16xf32>
    %cst_25 = arith.constant dense<0.000000e+00> : vector<8xf32>
    %43 = vector.multi_reduction <add>, %42, %cst_25 [1] : vector<8x16xf32> to vector<8xf32>
    %44 = vector.shape_cast %43 : vector<8xf32> to vector<8x1xf32>
    %45 = arith.subf %44, %29 : vector<8x1xf32>
    %46 = math.exp %45 : vector<8x1xf32>
    %47 = arith.divf %46, %34 : vector<8x1xf32>
    %c15_i32 = arith.constant 15 : i32
    %48 = vector.broadcast %c15_i32 : i32 to vector<8x1xi32>
    %49 = arith.cmpi eq, %36, %48 : vector<8x1xi32>
    %cst_26 = arith.constant 9.99999996E-13 : f32
    %50 = vector.broadcast %cst_26 : f32 to vector<8x1xf32>
    %51 = arith.addf %47, %50 : vector<8x1xf32>
    %52 = math.log %51 : vector<8x1xf32>
    %cst_27 = arith.constant 0.000000e+00 : f32
    %53 = vector.broadcast %cst_27 : f32 to vector<8x1xf32>
    %54 = arith.subf %53, %52 : vector<8x1xf32>
    %cst_28 = arith.constant 0.000000e+00 : f32
    %55 = vector.broadcast %cst_28 : f32 to vector<8x1xf32>
    %56 = arith.select %49, %55, %54 : vector<8x1xi1>, vector<8x1xf32>
    %cst_29 = arith.constant dense<0.000000e+00> : vector<1xf32>
    %57 = vector.multi_reduction <add>, %56, %cst_29 [0] : vector<8x1xf32> to vector<1xf32>
    %58 = vector.shape_cast %57 : vector<1xf32> to vector<1x1xf32>
    %59 = vector.shape_cast %58 : vector<1x1xf32> to vector<1x1x1xf32>
    %c0_30 = arith.constant 0 : index
    %c0_31 = arith.constant 0 : index
    %c0_32 = arith.constant 0 : index
    %60 = vector.load %arg9[%c0_30, %c0_31, %c0_32] : memref<1x1x1xf32, #tpu.memory_space<vmem>>, vector<1x1x1xf32>
    tpu.vector_store %arg9[%c0_30, %c0_31, %c0_32], %59 {strides = array<i32>} : memref<1x1x1xf32, #tpu.memory_space<vmem>>, vector<1x1x1xf32>,
    return
  }
  func.func @transform_0(%arg0: i32) -> (i32, i32, i32) {
    %c0_i32 = arith.constant 0 : i32
    %c0_i32_0 = arith.constant 0 : i32
    %c0_i32_1 = arith.constant 0 : i32
    return %arg0, %c0_i32, %c0_i32_0 : i32, i32, i32
  }
  func.func @transform_1(%arg0: i32) -> (i32, i32, i32) {
    %c0_i32 = arith.constant 0 : i32
    %c0_i32_0 = arith.constant 0 : i32
    %c0_i32_1 = arith.constant 0 : i32
    return %arg0, %c0_i32, %c0_i32_0 : i32, i32, i32
  }
  func.func @transform_2(%arg0: i32) -> (i32, i32) {
    %c0_i32 = arith.constant 0 : i32
    %c0_i32_0 = arith.constant 0 : i32
    %c0_i32_1 = arith.constant 0 : i32
    return %c0_i32, %c0_i32_0 : i32, i32
  }
  func.func @transform_3(%arg0: i32) -> (i32, i32) {
    %c0_i32 = arith.constant 0 : i32
    %c0_i32_0 = arith.constant 0 : i32
    %c0_i32_1 = arith.constant 0 : i32
    return %c0_i32, %c0_i32_0 : i32, i32
  }
  func.func @transform_4(%arg0: i32) -> (i32, i32) {
    %c0_i32 = arith.constant 0 : i32
    %c0_i32_0 = arith.constant 0 : i32
    %c0_i32_1 = arith.constant 0 : i32
    return %c0_i32, %c0_i32_0 : i32, i32
  }
  func.func @transform_5(%arg0: i32) -> (i32, i32) {
    %c0_i32 = arith.constant 0 : i32
    %c0_i32_0 = arith.constant 0 : i32
    %c0_i32_1 = arith.constant 0 : i32
    return %c0_i32, %c0_i32_0 : i32, i32
  }
  func.func @transform_6(%arg0: i32) -> (i32, i32, i32) {
    %c0_i32 = arith.constant 0 : i32
    %c0_i32_0 = arith.constant 0 : i32
    %c0_i32_1 = arith.constant 0 : i32
    return %arg0, %c0_i32, %c0_i32_0 : i32, i32, i32
  }
  func.func @transform_7(%arg0: i32) -> (i32, i32, i32) {
    %c0_i32 = arith.constant 0 : i32
    %c0_i32_0 = arith.constant 0 : i32
    %c0_i32_1 = arith.constant 0 : i32
    return %arg0, %c0_i32, %c0_i32_0 : i32, i32, i32
  }
  func.func @transform_8(%arg0: i32) -> (i32, i32, i32) {
    %c0_i32 = arith.constant 0 : i32
    %c0_i32_0 = arith.constant 0 : i32
    %c0_i32_1 = arith.constant 0 : i32
    return %arg0, %c0_i32, %c0_i32_0 : i32, i32, i32
  }
}

</mosaic_0001>

<llo_original>
// kernel: concept_generator_forward.1
$region0: #{concept_generator_forward.1}
  #allocation0 [shape = 'u32[]', space=smem, size = 0x4, offset = 0x4, fixed_abs, tag = 'smem constant byte address 0x4 - core index']
  #allocation1 [shape = 'u32[144,128]{1,0:T(1,128)}', space=vmem, size = 0x12000, scoped, tag = 'internal scratch']
  %s0 = inlined_call_operand.vmem [shape: f32[2,8,32], index: 0, kind: input, shape index: {}]
  %s1 = inlined_call_operand.vmem [shape: f32[2,16,32], index: 1, kind: input, shape index: {}]
  %s2 = inlined_call_operand.vmem [shape: f32[32,32], index: 2, kind: input, shape index: {}]
  %s3 = inlined_call_operand.vmem [shape: f32[1,32], index: 3, kind: input, shape index: {}]
  %s4 = inlined_call_operand.vmem [shape: f32[32,32], index: 4, kind: input, shape index: {}]
  %s5 = inlined_call_operand.vmem [shape: f32[1,32], index: 5, kind: input, shape index: {}]
  %s6 = inlined_call_operand.vmem [shape: f32[2,1,16], index: 6, kind: input, shape index: {}]
  %s7 = inlined_call_operand.vmem [shape: s32[2,8,1], index: 7, kind: input, shape index: {}]
  %s8 = inlined_call_operand.vmem [shape: f32[2,1,1], index: 8, kind: output, shape index: {}]
  %s9 = sld [smem:[#allocation0]]
  $region65: #{concept_generator_forward.1} parent=0
    _
  %s11 = ssub.s32 1, %s9
  %s12 = scalar_select 0, %s11, %s9
  loop: start=0, step=1, limit=4
  $region2: #{concept_generator_forward.1} parent=0 // loop_pre_header
    _
  $region3: #{concept_generator_forward.1} parent=0 // loop_header
    %s14 = sphi 0, %s18
    %p15 = scmp.ge.s32.totalorder %s14, 4
    %s24 = sphi 0, %s26
    %s27 = sphi 0, %s24
    %s28 = sphi 0, %s27
    %s44 = sphi 0, %s28
    %s50 = sphi 0, %s52
    %s53 = sphi 0, %s50
    %s54 = sphi 0, %s53
    %s70 = sphi 0, %s54
    %s74 = sphi 0, %s74
    %s76 = sphi 0, %s74
    %s77 = sphi 0, %s76
    %s91 = sphi 0, %s77
    %s95 = sphi 0, %s95
    %s97 = sphi 0, %s95
    %s98 = sphi 0, %s97
    %s112 = sphi 0, %s98
    %s116 = sphi 0, %s116
    %s118 = sphi 0, %s116
    %s119 = sphi 0, %s118
    %s133 = sphi 0, %s119
    %s137 = sphi 0, %s137
    %s139 = sphi 0, %s137
    %s140 = sphi 0, %s139
    %s154 = sphi 0, %s140
    %s160 = sphi 0, %s162
    %s163 = sphi 0, %s160
    %s164 = sphi 0, %s163
    %s180 = sphi 0, %s164
    %s186 = sphi 0, %s188
    %s189 = sphi 0, %s186
    %s190 = sphi 0, %s189
    %s206 = sphi 0, %s190
    %s212 = sphi 0, %s214
    %s215 = sphi 0, %s212
    %s216 = sphi 0, %s215
    %s232 = sphi 0, %s216
  $region4: #{concept_generator_forward.1} parent=0 // loop_header_branch
    %17 = sbr.rel (%p15) target = $region8
  $region5: #{concept_generator_forward.1} parent=0 // loop_body
    %s19 = ssub.s32 %s14, 1
    %s20 = ssub.s32 %s14, 2
    %s21 = sadd.s32 %s14, 1
    %s22 = ssub.s32 %s14, %s21
    %p23 = scmp.eq.s32.totalorder %s22, 0
    %s25 = sadd.s32 %s24, 1
    %s26 = scalar_select %p23, %s24, %s25
    %p29 = pneg %p23
    %p30 = scmp.eq.s32.totalorder %s14, 1
    %p31 = por %p29, %p30
    %p32 = scmp.ne.s32.totalorder %s24, %s27
    %p33 = scmp.eq.s32.totalorder %s14, 0
    %p34 = por %p32, %p33
    %p35 = scmp.ne.s32.totalorder %s24, %s27
    %p36 = scmp.eq.s32.totalorder %s19, 1
    %p37 = por %p35, %p36
    %p38 = scmp.ne.s32.totalorder %s27, %s28
    %p39 = scmp.eq.s32.totalorder %s19, 0
    %p40 = por %p38, %p39
    %p41 = scmp.ne.s32.totalorder %s27, %s28
    %p42 = scmp.eq.s32.totalorder %s20, 1
    %p43 = por %p41, %p42
    %p45 = scmp.ne.s32.totalorder %s28, %s44
    %p46 = scmp.eq.s32.totalorder %s20, 0
    %p47 = por %p45, %p46
    %s48 = ssub.s32 %s14, %s21
    %p49 = scmp.eq.s32.totalorder %s48, 0
    %s51 = sadd.s32 %s50, 1
    %s52 = scalar_select %p49, %s50, %s51
    %p55 = pneg %p49
    %p56 = scmp.eq.s32.totalorder %s14, 1
    %p57 = por %p55, %p56
    %p58 = scmp.ne.s32.totalorder %s50, %s53
    %p59 = scmp.eq.s32.totalorder %s14, 0
    %p60 = por %p58, %p59
    %p61 = scmp.ne.s32.totalorder %s50, %s53
    %p62 = scmp.eq.s32.totalorder %s19, 1
    %p63 = por %p61, %p62
    %p64 = scmp.ne.s32.totalorder %s53, %s54
    %p65 = scmp.eq.s32.totalorder %s19, 0
    %p66 = por %p64, %p65
    %p67 = scmp.ne.s32.totalorder %s53, %s54
    %p68 = scmp.eq.s32.totalorder %s20, 1
    %p69 = por %p67, %p68
    %p71 = scmp.ne.s32.totalorder %s54, %s70
    %p72 = scmp.eq.s32.totalorder %s20, 0
    %p73 = por %p71, %p72
    %s75 = sadd.s32 %s74, 1
    %p78 = scmp.eq.s32.totalorder %s14, 1
    %p79 = scmp.ne.s32.totalorder %s74, %s76
    %p80 = scmp.eq.s32.totalorder %s14, 0
    %p81 = por %p79, %p80
    %p82 = scmp.ne.s32.totalorder %s74, %s76
    %p83 = scmp.eq.s32.totalorder %s19, 1
    %p84 = por %p82, %p83
    %p85 = scmp.ne.s32.totalorder %s76, %s77
    %p86 = scmp.eq.s32.totalorder %s19, 0
    %p87 = por %p85, %p86
    %p88 = scmp.ne.s32.totalorder %s76, %s77
    %p89 = scmp.eq.s32.totalorder %s20, 1
    %p90 = por %p88, %p89
    %p92 = scmp.ne.s32.totalorder %s77, %s91
    %p93 = scmp.eq.s32.totalorder %s20, 0
    %p94 = por %p92, %p93
    %s96 = sadd.s32 %s95, 1
    %p99 = scmp.eq.s32.totalorder %s14, 1
    %p100 = scmp.ne.s32.totalorder %s95, %s97
    %p101 = scmp.eq.s32.totalorder %s14, 0
    %p102 = por %p100, %p101
    %p103 = scmp.ne.s32.totalorder %s95, %s97
    %p104 = scmp.eq.s32.totalorder %s19, 1
    %p105 = por %p103, %p104
    %p106 = scmp.ne.s32.totalorder %s97, %s98
    %p107 = scmp.eq.s32.totalorder %s19, 0
    %p108 = por %p106, %p107
    %p109 = scmp.ne.s32.totalorder %s97, %s98
    %p110 = scmp.eq.s32.totalorder %s20, 1
    %p111 = por %p109, %p110
    %p113 = scmp.ne.s32.totalorder %s98, %s112
    %p114 = scmp.eq.s32.totalorder %s20, 0
    %p115 = por %p113, %p114
    %s117 = sadd.s32 %s116, 1
    %p120 = scmp.eq.s32.totalorder %s14, 1
    %p121 = scmp.ne.s32.totalorder %s116, %s118
    %p122 = scmp.eq.s32.totalorder %s14, 0
    %p123 = por %p121, %p122
    %p124 = scmp.ne.s32.totalorder %s116, %s118
    %p125 = scmp.eq.s32.totalorder %s19, 1
    %p126 = por %p124, %p125
    %p127 = scmp.ne.s32.totalorder %s118, %s119
    %p128 = scmp.eq.s32.totalorder %s19, 0
    %p129 = por %p127, %p128
    %p130 = scmp.ne.s32.totalorder %s118, %s119
    %p131 = scmp.eq.s32.totalorder %s20, 1
    %p132 = por %p130, %p131
    %p134 = scmp.ne.s32.totalorder %s119, %s133
    %p135 = scmp.eq.s32.totalorder %s20, 0
    %p136 = por %p134, %p135
    %s138 = sadd.s32 %s137, 1
    %p141 = scmp.eq.s32.totalorder %s14, 1
    %p142 = scmp.ne.s32.totalorder %s137, %s139
    %p143 = scmp.eq.s32.totalorder %s14, 0
    %p144 = por %p142, %p143
    %p145 = scmp.ne.s32.totalorder %s137, %s139
    %p146 = scmp.eq.s32.totalorder %s19, 1
    %p147 = por %p145, %p146
    %p148 = scmp.ne.s32.totalorder %s139, %s140
    %p149 = scmp.eq.s32.totalorder %s19, 0
    %p150 = por %p148, %p149
    %p151 = scmp.ne.s32.totalorder %s139, %s140
    %p152 = scmp.eq.s32.totalorder %s20, 1
    %p153 = por %p151, %p152
    %p155 = scmp.ne.s32.totalorder %s140, %s154
    %p156 = scmp.eq.s32.totalorder %s20, 0
    %p157 = por %p155, %p156
    %s158 = ssub.s32 %s14, %s21
    %p159 = scmp.eq.s32.totalorder %s158, 0
    %s161 = sadd.s32 %s160, 1
    %s162 = scalar_select %p159, %s160, %s161
    %p165 = pneg %p159
    %p166 = scmp.eq.s32.totalorder %s14, 1
    %p167 = por %p165, %p166
    %p168 = scmp.ne.s32.totalorder %s160, %s163
    %p169 = scmp.eq.s32.totalorder %s14, 0
    %p170 = por %p168, %p169
    %p171 = scmp.ne.s32.totalorder %s160, %s163
    %p172 = scmp.eq.s32.totalorder %s19, 1
    %p173 = por %p171, %p172
    %p174 = scmp.ne.s32.totalorder %s163, %s164
    %p175 = scmp.eq.s32.totalorder %s19, 0
    %p176 = por %p174, %p175
    %p177 = scmp.ne.s32.totalorder %s163, %s164
    %p178 = scmp.eq.s32.totalorder %s20, 1
    %p179 = por %p177, %p178
    %p181 = scmp.ne.s32.totalorder %s164, %s180
    %p182 = scmp.eq.s32.totalorder %s20, 0
    %p183 = por %p181, %p182
    %s184 = ssub.s32 %s14, %s21
    %p185 = scmp.eq.s32.totalorder %s184, 0
    %s187 = sadd.s32 %s186, 1
    %s188 = scalar_select %p185, %s186, %s187
    %p191 = pneg %p185
    %p192 = scmp.eq.s32.totalorder %s14, 1
    %p193 = por %p191, %p192
    %p194 = scmp.ne.s32.totalorder %s186, %s189
    %p195 = scmp.eq.s32.totalorder %s14, 0
    %p196 = por %p194, %p195
    %p197 = scmp.ne.s32.totalorder %s186, %s189
    %p198 = scmp.eq.s32.totalorder %s19, 1
    %p199 = por %p197, %p198
    %p200 = scmp.ne.s32.totalorder %s189, %s190
    %p201 = scmp.eq.s32.totalorder %s19, 0
    %p202 = por %p200, %p201
    %p203 = scmp.ne.s32.totalorder %s189, %s190
    %p204 = scmp.eq.s32.totalorder %s20, 1
    %p205 = por %p203, %p204
    %p207 = scmp.ne.s32.totalorder %s190, %s206
    %p208 = scmp.eq.s32.totalorder %s20, 0
    %p209 = por %p207, %p208
    %s210 = ssub.s32 %s14, %s21
    %p211 = scmp.eq.s32.totalorder %s210, 0
    %s213 = sadd.s32 %s212, 1
    %s214 = scalar_select %p211, %s212, %s213
    %p217 = pneg %p211
    %p218 = scmp.eq.s32.totalorder %s14, 1
    %p219 = por %p217, %p218
    %p220 = scmp.ne.s32.totalorder %s212, %s215
    %p221 = scmp.eq.s32.totalorder %s14, 0
    %p222 = por %p220, %p221
    %p223 = scmp.ne.s32.totalorder %s212, %s215
    %p224 = scmp.eq.s32.totalorder %s19, 1
    %p225 = por %p223, %p224
    %p226 = scmp.ne.s32.totalorder %s215, %s216
    %p227 = scmp.eq.s32.totalorder %s19, 0
    %p228 = por %p226, %p227
    %p229 = scmp.ne.s32.totalorder %s215, %s216
    %p230 = scmp.eq.s32.totalorder %s20, 1
    %p231 = por %p229, %p230
    %p233 = scmp.ne.s32.totalorder %s216, %s232
    %p234 = scmp.eq.s32.totalorder %s20, 0
    %p235 = por %p233, %p234
    %p236 = scmp.le.s32.totalorder 1, %s14
    %p237 = scmp.lt.s32.totalorder %s14, 3
    %p238 = pnand %p236, %p237
    %p239 = pneg %p238
    // Predicated region
    $region9: #{concept_generator_forward.1} parent=5 // pred_check
      _
    $region10: #{concept_generator_forward.1} parent=5 // pred_check_branch
      %241 = sbr.rel (%p238) target = $region12
    $region11: #{concept_generator_forward.1} parent=5 // pred_region
      %s242 = ssub.s32 %s14, 1
      // Predicated region
      $region13: #{concept_generator_forward.1} parent=11 // pred_check
        %p243 = pneg %p87
      $region14: #{concept_generator_forward.1} parent=11 // pred_check_branch
        %245 = sbr.rel (%p243) target = $region16
      $region15: #{concept_generator_forward.1} parent=11 // pred_region
        _
      $region16: #{concept_generator_forward.1} parent=11 // pred_fallthru
        _
      // Predicated region
      $region17: #{concept_generator_forward.1} parent=11 // pred_check
        %p246 = pneg %p108
      $region18: #{concept_generator_forward.1} parent=11 // pred_check_branch
        %248 = sbr.rel (%p246) target = $region20
      $region19: #{concept_generator_forward.1} parent=11 // pred_region
        _
      $region20: #{concept_generator_forward.1} parent=11 // pred_fallthru
        _
      // Predicated region
      $region21: #{concept_generator_forward.1} parent=11 // pred_check
        %p249 = pneg %p129
      $region22: #{concept_generator_forward.1} parent=11 // pred_check_branch
        %251 = sbr.rel (%p249) target = $region24
      $region23: #{concept_generator_forward.1} parent=11 // pred_region
        _
      $region24: #{concept_generator_forward.1} parent=11 // pred_fallthru
        _
      // Predicated region
      $region25: #{concept_generator_forward.1} parent=11 // pred_check
        %p252 = pneg %p150
      $region26: #{concept_generator_forward.1} parent=11 // pred_check_branch
        %254 = sbr.rel (%p252) target = $region28
      $region27: #{concept_generator_forward.1} parent=11 // pred_region
        _
      $region28: #{concept_generator_forward.1} parent=11 // pred_fallthru
        _
    $region12: #{concept_generator_forward.1} parent=5 // pred_fallthru
      _
    %p255 = scmp.lt.s32.totalorder %s14, 2
    // Predicated region
    $region29: #{concept_generator_forward.1} parent=5 // pred_check
      %p256 = pneg %p255
    $region30: #{concept_generator_forward.1} parent=5 // pred_check_branch
      %258 = sbr.rel (%p256) target = $region32
    $region31: #{concept_generator_forward.1} parent=5 // pred_region
      // Predicated region
      $region33: #{concept_generator_forward.1} parent=31 // pred_check
        %p259 = pneg %p34
      $region34: #{concept_generator_forward.1} parent=31 // pred_check_branch
        %261 = sbr.rel (%p259) target = $region36
      $region35: #{concept_generator_forward.1} parent=31 // pred_region
        %p262 = scmp.lt.s32.totalorder %s14, 1
        %s263 = scalar_select %p262, %s14, 1
        %s264 = smul.addr %s263, 8
        %s265 = scalar_lea.vmem %s0, %s264
      $region36: #{concept_generator_forward.1} parent=31 // pred_fallthru
        _
      // Predicated region
      $region37: #{concept_generator_forward.1} parent=31 // pred_check
        %p266 = pneg %p60
      $region38: #{concept_generator_forward.1} parent=31 // pred_check_branch
        %268 = sbr.rel (%p266) target = $region40
      $region39: #{concept_generator_forward.1} parent=31 // pred_region
        %p269 = scmp.lt.s32.totalorder %s14, 1
        %s270 = scalar_select %p269, %s14, 1
        %s271 = smul.addr %s270, 2
        %s272 = smul.addr %s271, 8
        %s273 = scalar_lea.vmem %s1, %s272
      $region40: #{concept_generator_forward.1} parent=31 // pred_fallthru
        _
      // Predicated region
      $region41: #{concept_generator_forward.1} parent=31 // pred_check
        %p274 = pneg %p170
      $region42: #{concept_generator_forward.1} parent=31 // pred_check_branch
        %276 = sbr.rel (%p274) target = $region44
      $region43: #{concept_generator_forward.1} parent=31 // pred_region
        %p277 = scmp.lt.s32.totalorder %s14, 1
        %s278 = scalar_select %p277, %s14, 1
        %s279 = scalar_lea.vmem %s6, %s278
      $region44: #{concept_generator_forward.1} parent=31 // pred_fallthru
        _
      // Predicated region
      $region45: #{concept_generator_forward.1} parent=31 // pred_check
        %p280 = pneg %p196
      $region46: #{concept_generator_forward.1} parent=31 // pred_check_branch
        %282 = sbr.rel (%p280) target = $region48
      $region47: #{concept_generator_forward.1} parent=31 // pred_region
        %p283 = scmp.lt.s32.totalorder %s14, 1
        %s284 = scalar_select %p283, %s14, 1
        %s285 = smul.addr %s284, 8
        %s286 = scalar_lea.vmem %s7, %s285
      $region48: #{concept_generator_forward.1} parent=31 // pred_fallthru
        _
    $region32: #{concept_generator_forward.1} parent=5 // pred_fallthru
      _
    %p287 = scmp.le.s32.totalorder 1, %s14
    %p288 = scmp.lt.s32.totalorder %s14, 3
    %p289 = pnand %p287, %p288
    %p290 = pneg %p289
    // Predicated region
    $region49: #{concept_generator_forward.1} parent=5 // pred_check
      _
    $region50: #{concept_generator_forward.1} parent=5 // pred_check_branch
      %292 = sbr.rel (%p289) target = $region52
    $region51: #{concept_generator_forward.1} parent=5 // pred_region
      %s293 = ssub.s32 %s14, 1
      %p294 = scmp.lt.s32.totalorder %s19, 1
      %s295 = scalar_select %p294, %s19, 1
      %s296 = smul.addr %s295, 8
      %s297 = scalar_lea.vmem %s0, %s296
      %p298 = pneg %p40
      %p299 = pneg %p37
      %p300 = scmp.lt.s32.totalorder %s19, 1
      %s301 = scalar_select %p300, %s19, 1
      %s302 = smul.addr %s301, 2
      %s303 = smul.addr %s302, 8
      %s304 = scalar_lea.vmem %s1, %s303
      %p305 = pneg %p66
      %p306 = pneg %p63
      %p307 = pneg %p87
      %p308 = pneg %p84
      %p309 = pneg %p108
      %p310 = pneg %p105
      %p311 = pneg %p129
      %p312 = pneg %p126
      %p313 = pneg %p150
      %p314 = pneg %p147
      %p315 = scmp.lt.s32.totalorder %s19, 1
      %s316 = scalar_select %p315, %s19, 1
      %s317 = scalar_lea.vmem %s6, %s316
      %p318 = pneg %p176
      %p319 = pneg %p173
      %p320 = scmp.lt.s32.totalorder %s19, 1
      %s321 = scalar_select %p320, %s19, 1
      %s322 = smul.addr %s321, 8
      %s323 = scalar_lea.vmem %s7, %s322
      %p324 = pneg %p202
      %p325 = pneg %p199
      %p326 = pneg %p228
      %p327 = pneg %p225
      %p328 = scmp.lt.s32.totalorder %s19, 1
      %s329 = scalar_select %p328, %s19, 1
      %s330 = scalar_lea.vmem %s8, %s329
      %p331 = scmp.lt.s32.totalorder %s19, 1
      %s332 = scalar_select %p331, %s19, 1
      %s333 = smul.addr %s332, 8
      %s334 = scalar_lea.vmem %s0, %s333
      %p335 = scmp.lt.s32.totalorder %s19, 1
      %s336 = scalar_select %p335, %s19, 1
      %s337 = smul.addr %s336, 2
      %s338 = smul.addr %s337, 8
      %s339 = scalar_lea.vmem %s1, %s338
      %p340 = scmp.lt.s32.totalorder %s19, 1
      %s341 = scalar_select %p340, %s19, 1
      %s342 = scalar_lea.vmem %s6, %s341
      %p343 = scmp.lt.s32.totalorder %s19, 1
      %s344 = scalar_select %p343, %s19, 1
      %s345 = smul.addr %s344, 8
      %s346 = scalar_lea.vmem %s7, %s345
      %p347 = scmp.lt.s32.totalorder %s19, 1
      %s348 = scalar_select %p347, %s19, 1
      %s349 = scalar_lea.vmem %s8, %s348
      %v351 = vld [vmem:[%s334] sm:$0xff]
      %v352 = vld [vmem:[%s339] sm:$0xff]
      %v353 = vld [vmem:[%s339 + $0x8] sm:$0xff]
      %v354 = vpack.c.bf16 %v351, %v351
      %v355 = vld [vmem:[%s2] sm:$0xff]
      %v356 = vld [vmem:[%s2 + $0x8] sm:$0xff]
      %v357 = vld [vmem:[%s2 + $0x10] sm:$0xff]
      %v358 = vld [vmem:[%s2 + $0x18] sm:$0xff]
      %v359 = vpack.c.bf16 %v356, %v355
      %v360 = vpack.c.bf16 %v358, %v357
      %v361 = vld [vmem:[%s3] sm:$0x1]
      %v363 = vlaneseq
      %v364 = vshrl.u32 %v363, 7
      %v365 = vsub.s32 0, %v364
      %v366 = vrot.slane %v361, %v365
      %vm368 = vcmask 261120
      %v370 = vsel %vm368, %v354, 0
      %372 = vmatprep.subr.bf16.mxu0 0
      %373 = vmatpush1.bf16.msra.mxu0 %v359
      %374 = vmatprep.subr.bf16.mxu0 0
      %375 = vmatpush1.bf16.msra.mxu0 %v360
      %376 = vmatprep.subr.bf16.mxu0 0
      %377 = vmatpush1.bf16.msra.mxu0 0
      %378 = vmatprep.subr.bf16.mxu0 0
      %379 = vmatpush1.bf16.msra.mxu0 0
      %380 = vmatprep.subr.bf16.mxu0 0
      %381 = vmatpush1.bf16.msra.mxu0 0
      %382 = vmatprep.subr.bf16.mxu0 0
      %383 = vmatpush1.bf16.msra.mxu0 0
      %384 = vmatprep.subr.bf16.mxu0 0
      %385 = vmatpush1.bf16.msra.mxu0 0
      %386 = vmatprep.subr.bf16.mxu0 0
      %387 = vmatpush1.bf16.msra.mxu0 0
      %388 = vmatprep.subr.bf16.mxu0 0
      %389 = vmatpush1.bf16.msra.mxu0 0
      %390 = vmatprep.subr.bf16.mxu0 0
      %391 = vmatpush1.bf16.msra.mxu0 0
      %392 = vmatprep.subr.bf16.mxu0 0
      %393 = vmatpush1.bf16.msra.mxu0 0
      %394 = vmatprep.subr.bf16.mxu0 0
      %395 = vmatpush1.bf16.msra.mxu0 0
      %396 = vmatprep.subr.bf16.mxu0 0
      %397 = vmatpush1.bf16.msra.mxu0 0
      %398 = vmatprep.subr.bf16.mxu0 0
      %399 = vmatpush1.bf16.msra.mxu0 0
      %400 = vmatprep.subr.bf16.mxu0 0
      %401 = vmatpush1.bf16.msra.mxu0 0
      %402 = vmatprep.subr.bf16.mxu0 0
      %403 = vmatpush1.bf16.msra.mxu0 0
      %404 = vmatprep.mubr.bf16.mxu0 0
      %405 = vmatmul.mubr.bf16.gmra.mrb[0].mxu0 %v370
      %v406 = vpop.f32.mrb[0].mxu0
      %v407 = vadd.f32 %v366, %v406
      %v408 = vpop.f32.mrb[0].mxu0
      %v409 = vpop.f32.mrb[0].mxu0
      %v410 = vpop.f32.mrb[0].mxu0
      %411 = vdwg.mxu0
      %v412 = vmul.f32 %v407, 0.17677669
      %v413 = vpack.c.bf16 %v353, %v352
      %v414 = vld [vmem:[%s4] sm:$0xff]
      %v415 = vld [vmem:[%s4 + $0x8] sm:$0xff]
      %v416 = vld [vmem:[%s4 + $0x10] sm:$0xff]
      %v417 = vld [vmem:[%s4 + $0x18] sm:$0xff]
      %v418 = vpack.c.bf16 %v415, %v414
      %v419 = vpack.c.bf16 %v417, %v416
      %v420 = vld [vmem:[%s5] sm:$0x1]
      %v422 = vlaneseq
      %v423 = vshrl.u32 %v422, 7
      %v424 = vsub.s32 0, %v423
      %v425 = vrot.slane %v420, %v424
      %v428 = vsel %vm368, %v413, 0
      %430 = vmatprep.subr.bf16.mxu0 0
      %431 = vmatpush1.bf16.msra.mxu0 %v418
      %432 = vmatprep.subr.bf16.mxu0 0
      %433 = vmatpush1.bf16.msra.mxu0 %v419
      %434 = vmatprep.subr.bf16.mxu0 0
      %435 = vmatpush1.bf16.msra.mxu0 0
      %436 = vmatprep.subr.bf16.mxu0 0
      %437 = vmatpush1.bf16.msra.mxu0 0
      %438 = vmatprep.subr.bf16.mxu0 0
      %439 = vmatpush1.bf16.msra.mxu0 0
      %440 = vmatprep.subr.bf16.mxu0 0
      %441 = vmatpush1.bf16.msra.mxu0 0
      %442 = vmatprep.subr.bf16.mxu0 0
      %443 = vmatpush1.bf16.msra.mxu0 0
      %444 = vmatprep.subr.bf16.mxu0 0
      %445 = vmatpush1.bf16.msra.mxu0 0
      %446 = vmatprep.subr.bf16.mxu0 0
      %447 = vmatpush1.bf16.msra.mxu0 0
      %448 = vmatprep.subr.bf16.mxu0 0
      %449 = vmatpush1.bf16.msra.mxu0 0
      %450 = vmatprep.subr.bf16.mxu0 0
      %451 = vmatpush1.bf16.msra.mxu0 0
      %452 = vmatprep.subr.bf16.mxu0 0
      %453 = vmatpush1.bf16.msra.mxu0 0
      %454 = vmatprep.subr.bf16.mxu0 0
      %455 = vmatpush1.bf16.msra.mxu0 0
      %456 = vmatprep.subr.bf16.mxu0 0
      %457 = vmatpush1.bf16.msra.mxu0 0
      %458 = vmatprep.subr.bf16.mxu0 0
      %459 = vmatpush1.bf16.msra.mxu0 0
      %460 = vmatprep.subr.bf16.mxu0 0
      %461 = vmatpush1.bf16.msra.mxu0 0
      %462 = vmatprep.mubr.bf16.mxu0 0
      %463 = vmatmul.mubr.bf16.gmra.mrb[0].mxu0 %v428
      %v464 = vpop.f32.mrb[0].mxu0
      %v465 = vadd.f32 %v425, %v464
      %v466 = vpop.f32.mrb[0].mxu0
      %v467 = vpop.f32.mrb[0].mxu0
      %v468 = vadd.f32 %v425, %v467
      %v469 = vpop.f32.mrb[0].mxu0
      %470 = vdwg.mxu0
      %471 = vxpose.xlu0.b32.start [1/16] %v465, 128
      %472 = vxpose.xlu0.b32.cont [2/16] %v468, 128
      %473 = vxpose.xlu0.b32.cont [3/16] 0.0, 128
      %474 = vxpose.xlu0.b32.cont [4/16] 0.0, 128
      %475 = vxpose.xlu0.b32.cont [5/16] 0.0, 128
      %476 = vxpose.xlu0.b32.cont [6/16] 0.0, 128
      %477 = vxpose.xlu0.b32.cont [7/16] 0.0, 128
      %478 = vxpose.xlu0.b32.cont [8/16] 0.0, 128
      %479 = vxpose.xlu0.b32.cont [9/16] 0.0, 128
      %480 = vxpose.xlu0.b32.cont [10/16] 0.0, 128
      %481 = vxpose.xlu0.b32.cont [11/16] 0.0, 128
      %482 = vxpose.xlu0.b32.cont [12/16] 0.0, 128
      %483 = vxpose.xlu0.b32.cont [13/16] 0.0, 128
      %484 = vxpose.xlu0.b32.cont [14/16] 0.0, 128
      %485 = vxpose.xlu0.b32.cont [15/16] 0.0, 128
      %486 = vxpose.xlu0.b32.end [16/16] 0.0, 128
      %v487 = vpop.trf.xlu0
      %v488 = vpop.trf.xlu0
      %v489 = vpop.trf.xlu0
      %v490 = vpop.trf.xlu0
      %v491 = vpop.trf.xlu0
      %v492 = vpop.trf.xlu0
      %v493 = vpop.trf.xlu0
      %v494 = vpop.trf.xlu0
      %v495 = vpop.trf.xlu0
      %v496 = vpop.trf.xlu0
      %v497 = vpop.trf.xlu0
      %v498 = vpop.trf.xlu0
      %v499 = vpop.trf.xlu0
      %v500 = vpop.trf.xlu0
      %v501 = vpop.trf.xlu0
      %v502 = vpop.trf.xlu0
      %v503 = vpack.c.bf16 %v488, %v487
      %v504 = vpack.c.bf16 %v490, %v489
      %v505 = vpack.c.bf16 %v412, %v412
      %v506 = vld [vmem:[%s342] sm:$0x1]
      %v508 = vlaneseq
      %v509 = vshrl.u32 %v508, 7
      %v510 = vsub.s32 0, %v509
      %v511 = vrot.slane %v506, %v510
      %v514 = vsel %vm368, %v505, 0
      %516 = vmatprep.subr.bf16.mxu0 0
      %517 = vmatpush1.bf16.msra.mxu0 %v503
      %518 = vmatprep.subr.bf16.mxu0 0
      %519 = vmatpush1.bf16.msra.mxu0 %v504
      %520 = vmatprep.subr.bf16.mxu0 0
      %521 = vmatpush1.bf16.msra.mxu0 0
      %522 = vmatprep.subr.bf16.mxu0 0
      %523 = vmatpush1.bf16.msra.mxu0 0
      %524 = vmatprep.subr.bf16.mxu0 0
      %525 = vmatpush1.bf16.msra.mxu0 0
      %526 = vmatprep.subr.bf16.mxu0 0
      %527 = vmatpush1.bf16.msra.mxu0 0
      %528 = vmatprep.subr.bf16.mxu0 0
      %529 = vmatpush1.bf16.msra.mxu0 0
      %530 = vmatprep.subr.bf16.mxu0 0
      %531 = vmatpush1.bf16.msra.mxu0 0
      %532 = vmatprep.subr.bf16.mxu0 0
      %533 = vmatpush1.bf16.msra.mxu0 0
      %534 = vmatprep.subr.bf16.mxu0 0
      %535 = vmatpush1.bf16.msra.mxu0 0
      %536 = vmatprep.subr.bf16.mxu0 0
      %537 = vmatpush1.bf16.msra.mxu0 0
      %538 = vmatprep.subr.bf16.mxu0 0
      %539 = vmatpush1.bf16.msra.mxu0 0
      %540 = vmatprep.subr.bf16.mxu0 0
      %541 = vmatpush1.bf16.msra.mxu0 0
      %542 = vmatprep.subr.bf16.mxu0 0
      %543 = vmatpush1.bf16.msra.mxu0 0
      %544 = vmatprep.subr.bf16.mxu0 0
      %545 = vmatpush1.bf16.msra.mxu0 0
      %546 = vmatprep.subr.bf16.mxu0 0
      %547 = vmatpush1.bf16.msra.mxu0 0
      %548 = vmatprep.mubr.bf16.mxu0 0
      %549 = vmatmul.mubr.bf16.gmra.mrb[0].mxu0 %v514
      %v550 = vpop.f32.mrb[0].mxu0
      %v551 = vadd.f32 %v511, %v550
      %v552 = vpop.f32.mrb[0].mxu0
      %v553 = vpop.f32.mrb[0].mxu0
      %v554 = vpop.f32.mrb[0].mxu0
      %555 = vdwg.mxu0
      %vm556 = vcmask 130048
      %v557 = vsel %vm556, %v551, -inf
      %558 = vmax.xlane.f32.xlu0 %v557
      %v559 = vpop.xlane.xlu0 %558
      %v560 = vsub.f32 %v551, %v559
      %v561 = vmul.f32 %v560, 1.442695
      %v562 = vpow.pop %v561
      %v563 = vsel %vm556, %v562, 0.0
      %564 = vadd.xlane.f32.xlu0 %v563
      %v565 = vpop.xlane.xlu0 %564
      %v566 = vld [vmem:[%s346] sm:$0xff]
      %v567 = vlaneseq
      %v568 = vand.u32 %v567, 127
      %569 = vset.pattern.permute.xlu0 0
      %570 = vperm.xlu0 %569, %v566
      %v571 = vpop.permute.xlu0 %570
      %vm572 = vcmp.eq.s32.totalorder %v568, %v571
      %v573 = vsel %vm572, %v551, 0.0
      %v574 = vsel %vm556, %v573, 0.0
      %575 = vadd.xlane.f32.xlu0 %v574
      %v576 = vpop.xlane.xlu0 %575
      %v577 = vsub.f32 %v576, %v559
      %v578 = vmul.f32 %v577, 1.442695
      %v579 = vpow.pop %v578
      %v580 = vrcp.pop %v565
      %v581 = vmul.f32 %v579, %v580
      %vm582 = vcmp.eq.s32.totalorder %v566, 15
      %v583 = vadd.f32 %v581, 1e-12
      %v584 = vlog2.pop %v583
      %v585 = vmul.f32 %v584, 0.6931472
      %v586 = vsub.f32 0.0, %v585
      %v587 = vsel %vm582, 0.0, %v586
      %vm588 = vcmask 7168
      %v589 = vsel %vm588, %v587, 0.0
      %v590 = vrot.slane %v589, 4
      %v591 = vadd.f32 %v589, %v590
      %v592 = vrot.slane %v591, 2
      %v593 = vadd.f32 %v591, %v592
      %v594 = vrot.slane %v593, 1
      %v595 = vadd.f32 %v593, %v594
      %vm596 = vcmask 0
      %597 = vst.msk [vmem:[%s349] sm:$0x1] %vm596, %v595
      %p598 = scmp.lt.s32.totalorder %s19, 1
      %s599 = scalar_select %p598, %s19, 1
      %s600 = scalar_lea.vmem %s8, %s599
      // Predicated region
      $region53: #{concept_generator_forward.1} parent=51 // pred_check
        %p601 = pneg %p225
      $region54: #{concept_generator_forward.1} parent=51 // pred_check_branch
        %603 = sbr.rel (%p601) target = $region56
      $region55: #{concept_generator_forward.1} parent=51 // pred_region
        _
      $region56: #{concept_generator_forward.1} parent=51 // pred_fallthru
        _
    $region52: #{concept_generator_forward.1} parent=5 // pred_fallthru
      _
    %p604 = scmp.le.s32.totalorder 2, %s14
    // Predicated region
    $region57: #{concept_generator_forward.1} parent=5 // pred_check
      %p605 = pneg %p604
    $region58: #{concept_generator_forward.1} parent=5 // pred_check_branch
      %607 = sbr.rel (%p605) target = $region60
    $region59: #{concept_generator_forward.1} parent=5 // pred_region
      %s608 = ssub.s32 %s14, 2
      // Predicated region
      $region61: #{concept_generator_forward.1} parent=59 // pred_check
        %p609 = pneg %p231
      $region62: #{concept_generator_forward.1} parent=59 // pred_check_branch
        %611 = sbr.rel (%p609) target = $region64
      $region63: #{concept_generator_forward.1} parent=59 // pred_region
        %p612 = scmp.lt.s32.totalorder %s20, 1
        %s613 = scalar_select %p612, %s20, 1
        %s614 = scalar_lea.vmem %s8, %s613
      $region64: #{concept_generator_forward.1} parent=59 // pred_fallthru
        _
    $region60: #{concept_generator_forward.1} parent=5 // pred_fallthru
      _
  $region6: #{concept_generator_forward.1} parent=0 // loop_footer
    %s18 = sadd.s32 1, %s14
  $region7: #{concept_generator_forward.1} parent=0 // loop_footer_branch
    %13 = sbr.rel target = $region3
  $region8: #{concept_generator_forward.1} parent=0 // loop_exit
    _

</llo_original>
